<compile_context>
chip_gen: v5e
topology: v5e:2x2
jax: 0.10.0
libtpu: 0.0.40
codegen_flags: <defaults>
</compile_context>

<pallas_src>
import jax
import jax.numpy as jnp
from jax.experimental import pallas as pl
from jax.experimental.pallas import tpu as pltpu


# ---------------------------------------------------------------------------
# Kernel: one fused layer-1 matmul + two small layer-2 matmuls, all on the MXU
# ---------------------------------------------------------------------------
def _make_kernel(hidden):
    def kernel(x_ref, w1_ref, b1_ref, w2c_ref, b2c_ref, w2s_ref, b2s_ref,
               cls_ref, surv_ref):
        # Layer 1 (both heads fused; attention pre-folded into w1): (tb, D) @ (D, 2H).
        h = jnp.dot(x_ref[...], w1_ref[...], preferred_element_type=jnp.float32)
        h = jnp.maximum(h + b1_ref[...], 0.0)        # ReLU; Dropout(0.2) == identity (eval)
        h = h.astype(w2c_ref.dtype)                  # bf16 for the second MXU pass

        # Layer 2, classifier head: (tb, H) @ (H, C); slice at lane-aligned H boundary.
        cls_ref[...] = (
            jnp.dot(h[:, :hidden], w2c_ref[...], preferred_element_type=jnp.float32)
            + b2c_ref[...]).astype(cls_ref.dtype)

        # Layer 2, survival head: (tb, H) @ (H, 1).
        surv_ref[...] = (
            jnp.dot(h[:, hidden:], w2s_ref[...], preferred_element_type=jnp.float32)
            + b2s_ref[...]).astype(surv_ref.dtype)

    return kernel


# ---------------------------------------------------------------------------
# One-time host-side parameter fusion (hoisted out of the per-call path)
# ---------------------------------------------------------------------------
def fuse_params(params, *, compute_dtype=jnp.bfloat16):
    """Fold attention into layer-1 weights ((x*a)@W == x@(a*W)), concatenate both
    heads' first layers into one (D, 2H) weight, and cast MXU inputs to bf16."""
    attn = params["attention_weights"].astype(jnp.float32)
    w1f = jnp.concatenate(
        [attn[:, None] * params["cls_w1"], attn[:, None] * params["sur_w1"]],
        axis=1).astype(compute_dtype)                                    # (D, 2H)
    b1f = jnp.concatenate(
        [params["cls_b1"], params["sur_b1"]])[None, :].astype(jnp.float32)  # (1, 2H)
    return {
        "w1f": w1f, "b1f": b1f,
        "w2c": params["cls_w2"].astype(compute_dtype),                   # (H, C)
        "b2c": params["cls_b2"][None, :].astype(jnp.float32),            # (1, C)
        "w2s": params["sur_w2"].astype(compute_dtype),                   # (H, 1)
        "b2s": params["sur_b2"][None, :].astype(jnp.float32),            # (1, 1)
        "attention_weights": params["attention_weights"],
    }


def _ceil_to(x, m):
    return ((x + m - 1) // m) * m


def _pick_batch_tile(batch, block_b=None, max_tile=1024):
    """Rows per grid step (multiple of 8) and the zero-padded batch it implies."""
    if block_b is not None:
        tile = _ceil_to(max(int(block_b), 8), 8)
    else:
        steps = max(1, pl.cdiv(batch, max_tile))
        if steps == 1 and batch >= 512:
            steps = 2            # >= 2 balanced tiles -> both v7x TensorCores get work
        tile = _ceil_to(max(1, pl.cdiv(batch, steps)), 8)
    padded = pl.cdiv(batch, tile) * tile
    return tile, padded


# ---------------------------------------------------------------------------
# Wrapper
# ---------------------------------------------------------------------------
def prediction_module_forward(features, fused, *, block_b=None):
    """features: [B, D] -> (classification [B, C], survival [B, 1], attention [D])."""
    B, D = features.shape
    H2 = fused["w1f"].shape[1]
    H = H2 // 2
    C = fused["w2c"].shape[1]
    compute_dtype = fused["w1f"].dtype

    tb, padded_B = _pick_batch_tile(B, block_b)
    x = features.astype(compute_dtype)
    if padded_B != B:
        x = jnp.pad(x, ((0, padded_B - B), (0, 0)))   # zero rows; discarded after the call

    full = lambda shape: pl.BlockSpec(shape, lambda i: (0,) * len(shape))

    cls, surv = pl.pallas_call(
        _make_kernel(H),
        out_shape=(
            jax.ShapeDtypeStruct((padded_B, C), jnp.float32),
            jax.ShapeDtypeStruct((padded_B, 1), jnp.float32),
        ),
        grid_spec=pltpu.PrefetchScalarGridSpec(
            num_scalar_prefetch=0,
            grid=(padded_B // tb,),
            in_specs=[
                pl.BlockSpec((tb, D), lambda i: (i, 0)),   # only the feature tile is pipelined
                full((D, H2)), full((1, H2)),              # fused layer-1 weight / bias
                full((H, C)),  full((1, C)),               # classifier layer-2
                full((H, 1)),  full((1, 1)),               # survival layer-2
            ],
            out_specs=(
                pl.BlockSpec((tb, C), lambda i: (i, 0)),
                pl.BlockSpec((tb, 1), lambda i: (i, 0)),
            ),
        ),
        compiler_params=pltpu.CompilerParams(
            dimension_semantics=("parallel",),   # shards the batch grid across v7x's 2 TCs
        ),
    )(x, fused["w1f"], fused["b1f"], fused["w2c"], fused["b2c"],
      fused["w2s"], fused["b2s"])

    if padded_B != B:
        cls, surv = cls[:B], surv[:B]
    return cls, surv, fused["attention_weights"]


# ---------------------------------------------------------------------------
# Parameter init (mirrors nn.Linear; weights stored transposed as (in, out))
# ---------------------------------------------------------------------------
def init_params(key, input_dim=256, num_classes=4):
    H = input_dim // 2
    k1, k2, k3, k4 = jax.random.split(key, 4)

    def linear(k, fan_in, fan_out):
        bound = 1.0 / jnp.sqrt(fan_in)
        kw, kb = jax.random.split(k)
        w = jax.random.uniform(kw, (fan_in, fan_out), jnp.float32, -bound, bound)
        b = jax.random.uniform(kb, (fan_out,), jnp.float32, -bound, bound)
        return w, b

    cls_w1, cls_b1 = linear(k1, input_dim, H)
    cls_w2, cls_b2 = linear(k2, H, num_classes)
    sur_w1, sur_b1 = linear(k3, input_dim, H)
    sur_w2, sur_b2 = linear(k4, H, 1)

    return {
        "attention_weights": jnp.ones((input_dim,), jnp.float32) / input_dim,
        "cls_w1": cls_w1, "cls_b1": cls_b1,
        "cls_w2": cls_w2, "cls_b2": cls_b2,
        "sur_w1": sur_w1, "sur_b1": sur_b1,
        "sur_w2": sur_w2, "sur_b2": sur_b2,
    }


def reference_forward(features, params):
    wf = features * params["attention_weights"][None, :]
    h1 = jnp.maximum(wf @ params["cls_w1"] + params["cls_b1"], 0.0)
    cls = h1 @ params["cls_w2"] + params["cls_b2"]
    h2 = jnp.maximum(wf @ params["sur_w1"] + params["sur_b1"], 0.0)
    surv = h2 @ params["sur_w2"] + params["sur_b2"]
    return cls, surv, params["attention_weights"]


if __name__ == "__main__":
    key = jax.random.PRNGKey(0)
    kx, kp, kx2 = jax.random.split(key, 3)

    D, C = 256, 4
    params = init_params(kp, input_dim=D, num_classes=C)
    fused = fuse_params(params)                       # one-time host-side fusion
    fwd = jax.jit(prediction_module_forward)

    # Case 1: B a multiple of 8 -> single large tile, no padding.
    B = 64
    features = jax.random.normal(kx, (B, D), jnp.float32)
    cls_out, surv_out, attn_out = fwd(features, fused)
    jax.block_until_ready((cls_out, surv_out, attn_out))

    cls_ref, surv_ref, attn_ref = reference_forward(features, params)
    assert cls_out.shape == (B, C) and surv_out.shape == (B, 1) and attn_out.shape == (D,)
    assert jnp.allclose(cls_out, cls_ref, atol=1e-2, rtol=1e-2)   # bf16 MXU inputs
    assert jnp.allclose(surv_out, surv_ref, atol=1e-2, rtol=1e-2)
    assert jnp.allclose(attn_out, attn_ref)

    # Case 2: awkward batch (not a multiple of 8) -> exercises the cdiv/pad path.
    B2 = 36
    features2 = jax.random.normal(kx2, (B2, D), jnp.float32)
    cls2, surv2, _ = fwd(features2, fused)
    jax.block_until_ready((cls2, surv2))
    cls2_ref, surv2_ref, _ = reference_forward(features2, params)
    assert cls2.shape == (B2, C) and surv2.shape == (B2, 1)
    assert jnp.allclose(cls2, cls2_ref, atol=1e-2, rtol=1e-2)
    assert jnp.allclose(surv2, surv2_ref, atol=1e-2, rtol=1e-2)

    print("KERNEL_OK")
</pallas_src>

<mosaic_0001>
module attributes {stable_mosaic.version = 11 : i64} {
  func.func @kernel(%arg0: i32, %arg1: memref<64x256xbf16, #tpu.memory_space<vmem>>, %arg2: memref<256x256xbf16, #tpu.memory_space<vmem>>, %arg3: memref<1x256xf32, #tpu.memory_space<vmem>>, %arg4: memref<128x4xbf16, #tpu.memory_space<vmem>>, %arg5: memref<1x4xf32, #tpu.memory_space<vmem>>, %arg6: memref<128x1xbf16, #tpu.memory_space<vmem>>, %arg7: memref<1x1xf32, #tpu.memory_space<vmem>>, %arg8: memref<64x4xf32, #tpu.memory_space<vmem>>, %arg9: memref<64x1xf32, #tpu.memory_space<vmem>>) attributes {dimension_semantics = [#tpu.dimension_semantics<parallel>], iteration_bounds = array<i64: 1>, scalar_prefetch = 0 : i64, scratch_operands = 0 : i64, tpu.core_type = #tpu.core_type<tc>, window_params = [{transform_indices = @transform_0, window_bounds = array<i64: 64, 256>}, {pipeline_mode = #tpu.pipeline_mode<synchronous>, transform_indices = @transform_1, window_bounds = array<i64: 256, 256>}, {pipeline_mode = #tpu.pipeline_mode<synchronous>, transform_indices = @transform_2, window_bounds = array<i64: 1, 256>}, {pipeline_mode = #tpu.pipeline_mode<synchronous>, transform_indices = @transform_3, window_bounds = array<i64: 128, 4>}, {pipeline_mode = #tpu.pipeline_mode<synchronous>, transform_indices = @transform_4, window_bounds = array<i64: 1, 4>}, {pipeline_mode = #tpu.pipeline_mode<synchronous>, transform_indices = @transform_5, window_bounds = array<i64: 128, 1>}, {pipeline_mode = #tpu.pipeline_mode<synchronous>, transform_indices = @transform_6, window_bounds = array<i64: 1, 1>}, {transform_indices = @transform_7, window_bounds = array<i64: 64, 4>}, {transform_indices = @transform_8, window_bounds = array<i64: 64, 1>}]} {
    %c0 = arith.constant 0 : index
    %c0_0 = arith.constant 0 : index
    %0 = vector.load %arg1[%c0, %c0_0] : memref<64x256xbf16, #tpu.memory_space<vmem>>, vector<64x256xbf16>
    %c0_1 = arith.constant 0 : index
    %c0_2 = arith.constant 0 : index
    %1 = vector.load %arg2[%c0_1, %c0_2] : memref<256x256xbf16, #tpu.memory_space<vmem>>, vector<256x256xbf16>
    %cst = arith.constant dense<0.000000e+00> : vector<64x256xf32>
    %2 = tpu.matmul %0, %1, %cst {dimension_numbers = #tpu.dot_dimension_numbers<[1], [0], [0], [1], [0, 0, 1, 1], [], []>} : vector<64x256xbf16>, vector<256x256xbf16>, vector<64x256xf32> -> vector<64x256xf32>
    %c0_3 = arith.constant 0 : index
    %c0_4 = arith.constant 0 : index
    %3 = vector.load %arg3[%c0_3, %c0_4] : memref<1x256xf32, #tpu.memory_space<vmem>>, vector<1x256xf32>
    %4 = vector.broadcast %3 : vector<1x256xf32> to vector<64x256xf32>
    %5 = arith.addf %2, %4 : vector<64x256xf32>
    %cst_5 = arith.constant 0.000000e+00 : f32
    %6 = vector.broadcast %cst_5 : f32 to vector<64x256xf32>
    %7 = arith.maximumf %5, %6 : vector<64x256xf32>
    %8 = arith.truncf %7 : vector<64x256xf32> to vector<64x256xbf16>
    %9 = vector.extract_strided_slice %8 {offsets = [0, 0], sizes = [64, 128], strides = [1, 1]} : vector<64x256xbf16> to vector<64x128xbf16>
    %c0_6 = arith.constant 0 : index
    %c0_7 = arith.constant 0 : index
    %10 = vector.load %arg4[%c0_6, %c0_7] : memref<128x4xbf16, #tpu.memory_space<vmem>>, vector<128x4xbf16>
    %cst_8 = arith.constant dense<0.000000e+00> : vector<64x4xf32>
    %11 = tpu.matmul %9, %10, %cst_8 {dimension_numbers = #tpu.dot_dimension_numbers<[1], [0], [0], [1], [0, 0, 1, 1], [], []>} : vector<64x128xbf16>, vector<128x4xbf16>, vector<64x4xf32> -> vector<64x4xf32>
    %c0_9 = arith.constant 0 : index
    %c0_10 = arith.constant 0 : index
    %12 = vector.load %arg5[%c0_9, %c0_10] : memref<1x4xf32, #tpu.memory_space<vmem>>, vector<1x4xf32>
    %13 = vector.broadcast %12 : vector<1x4xf32> to vector<64x4xf32>
    %14 = arith.addf %11, %13 : vector<64x4xf32>
    %c0_11 = arith.constant 0 : index
    %c0_12 = arith.constant 0 : index
    %15 = vector.load %arg8[%c0_11, %c0_12] : memref<64x4xf32, #tpu.memory_space<vmem>>, vector<64x4xf32>
    tpu.vector_store %arg8[%c0_11, %c0_12], %14 {strides = array<i32>} : memref<64x4xf32, #tpu.memory_space<vmem>>, vector<64x4xf32>,
    %16 = vector.extract_strided_slice %8 {offsets = [0, 128], sizes = [64, 128], strides = [1, 1]} : vector<64x256xbf16> to vector<64x128xbf16>
    %c0_13 = arith.constant 0 : index
    %c0_14 = arith.constant 0 : index
    %17 = vector.load %arg6[%c0_13, %c0_14] : memref<128x1xbf16, #tpu.memory_space<vmem>>, vector<128x1xbf16>
    %cst_15 = arith.constant dense<0.000000e+00> : vector<64x1xf32>
    %18 = tpu.matmul %16, %17, %cst_15 {dimension_numbers = #tpu.dot_dimension_numbers<[1], [0], [0], [1], [0, 0, 1, 1], [], []>} : vector<64x128xbf16>, vector<128x1xbf16>, vector<64x1xf32> -> vector<64x1xf32>
    %c0_16 = arith.constant 0 : index
    %c0_17 = arith.constant 0 : index
    %19 = vector.load %arg7[%c0_16, %c0_17] : memref<1x1xf32, #tpu.memory_space<vmem>>, vector<1x1xf32>
    %20 = vector.broadcast %19 : vector<1x1xf32> to vector<64x1xf32>
    %21 = arith.addf %18, %20 : vector<64x1xf32>
    %c0_18 = arith.constant 0 : index
    %c0_19 = arith.constant 0 : index
    %22 = vector.load %arg9[%c0_18, %c0_19] : memref<64x1xf32, #tpu.memory_space<vmem>>, vector<64x1xf32>
    tpu.vector_store %arg9[%c0_18, %c0_19], %21 {strides = array<i32>} : memref<64x1xf32, #tpu.memory_space<vmem>>, vector<64x1xf32>,
    return
  }
  func.func @transform_0(%arg0: i32) -> (i32, i32) {
    %c0_i32 = arith.constant 0 : i32
    %c0_i32_0 = arith.constant 0 : i32
    return %arg0, %c0_i32 : i32, i32
  }
  func.func @transform_1(%arg0: i32) -> (i32, i32) {
    %c0_i32 = arith.constant 0 : i32
    %c0_i32_0 = arith.constant 0 : i32
    %c0_i32_1 = arith.constant 0 : i32
    return %c0_i32, %c0_i32_0 : i32, i32
  }
  func.func @transform_2(%arg0: i32) -> (i32, i32) {
    %c0_i32 = arith.constant 0 : i32
    %c0_i32_0 = arith.constant 0 : i32
    %c0_i32_1 = arith.constant 0 : i32
    return %c0_i32, %c0_i32_0 : i32, i32
  }
  func.func @transform_3(%arg0: i32) -> (i32, i32) {
    %c0_i32 = arith.constant 0 : i32
    %c0_i32_0 = arith.constant 0 : i32
    %c0_i32_1 = arith.constant 0 : i32
    return %c0_i32, %c0_i32_0 : i32, i32
  }
  func.func @transform_4(%arg0: i32) -> (i32, i32) {
    %c0_i32 = arith.constant 0 : i32
    %c0_i32_0 = arith.constant 0 : i32
    %c0_i32_1 = arith.constant 0 : i32
    return %c0_i32, %c0_i32_0 : i32, i32
  }
  func.func @transform_5(%arg0: i32) -> (i32, i32) {
    %c0_i32 = arith.constant 0 : i32
    %c0_i32_0 = arith.constant 0 : i32
    %c0_i32_1 = arith.constant 0 : i32
    return %c0_i32, %c0_i32_0 : i32, i32
  }
  func.func @transform_6(%arg0: i32) -> (i32, i32) {
    %c0_i32 = arith.constant 0 : i32
    %c0_i32_0 = arith.constant 0 : i32
    %c0_i32_1 = arith.constant 0 : i32
    return %c0_i32, %c0_i32_0 : i32, i32
  }
  func.func @transform_7(%arg0: i32) -> (i32, i32) {
    %c0_i32 = arith.constant 0 : i32
    %c0_i32_0 = arith.constant 0 : i32
    return %arg0, %c0_i32 : i32, i32
  }
  func.func @transform_8(%arg0: i32) -> (i32, i32) {
    %c0_i32 = arith.constant 0 : i32
    %c0_i32_0 = arith.constant 0 : i32
    return %arg0, %c0_i32 : i32, i32
  }
}

</mosaic_0001>

<llo_original>
// kernel: prediction_module_forward.1
$region0: #{prediction_module_forward.1}
  #allocation0 [shape = 'u32[]', space=smem, size = 0x4, offset = 0x4, fixed_abs, tag = 'smem constant byte address 0x4 - core index']
  #allocation1 [shape = 'u32[72,128]{1,0:T(1,128)}', space=vmem, size = 0x9000, scoped, tag = 'internal scratch']
  #allocation2 [shape = 'f32[1,1]{1,0:T(1,128)S(1)}', space=vmem, size = 0x200, scoped, tag = 'scoped memory for prediction_module_forward.1']
  %s0 = inlined_call_operand.vmem [shape: bf16[64,256], index: 0, kind: input, shape index: {}]
  %s1 = inlined_call_operand.hbm [shape: bf16[256,256], index: 1, kind: input, shape index: {}]
  %s2 = inlined_call_operand.vmem [shape: f32[1,256], index: 2, kind: input, shape index: {}]
  %s3 = inlined_call_operand.vmem [shape: bf16[128,4], index: 3, kind: input, shape index: {}]
  %s4 = inlined_call_operand.vmem [shape: f32[1,4], index: 4, kind: input, shape index: {}]
  %s5 = inlined_call_operand.vmem [shape: bf16[128,1], index: 5, kind: input, shape index: {}]
  %s6 = inlined_call_operand.<no memory space> [shape: f32[1,1], index: 6, kind: input, shape index: {}]
  %s7 = inlined_call_operand.vmem [shape: f32[64,4], index: 7, kind: output, shape index: {0}]
  %s8 = inlined_call_operand.vmem [shape: f32[64,1], index: 8, kind: output, shape index: {1}]
  %9 = xla_tuple %s7, %s8
  %s10 = sld [smem:[#allocation0]]
  $region50: #{prediction_module_forward.1} parent=0
    _
  %s12 = ssub.s32 1, %s10
  %s13 = scalar_select 0, %s12, %s10
  %v14 = vstv %s6
  %15 = vst [vmem:[#allocation2] sm:$0x1] %v14
  $region1: #{prediction_module_forward.1} parent=0
    #allocation3 [shape = 'u8[131072]{0}', space=vmem, size = 0x20000, scoped, tag = 'input window, operand 1, single buffered']
    #allocation4 [shape = 's32[1]{0}', space=sflag, size = 0x4, scoped, tag = 'scoped memory for prediction_module_forward.1']
    %16 = vsyncpa [#allocation4], 0
    // Predicated region
    $region2: #{prediction_module_forward.1} parent=1 // pred_check
      _
    $region3: #{prediction_module_forward.1} parent=1 // pred_check_branch
      %18 = sbr.rel (0) target = $region5
    $region4: #{prediction_module_forward.1} parent=1 // pred_region
      _
    $region5: #{prediction_module_forward.1} parent=1 // pred_fallthru
      _
    // Predicated region
    $region6: #{prediction_module_forward.1} parent=1 // pred_check
      _
    $region7: #{prediction_module_forward.1} parent=1 // pred_check_branch
      %20 = sbr.rel (0) target = $region9
    $region8: #{prediction_module_forward.1} parent=1 // pred_region
      %22 = vsyncadd [#allocation4], 0
      %s23 = sshll.u32 %s1, 4
      %s24 = int_to_ptr.hbm [resolvable:$true] %s23
      %s25 = sshll.u32 [#allocation3], 4
      %s26 = int_to_ptr.vmem [resolvable:$true] %s25
      %31 = dma.hbm_to_vmem [thread:$0]  %s24, 4096, %s26, [#allocation4], 128, 128, 8
    $region9: #{prediction_module_forward.1} parent=1 // pred_fallthru
      _
    // Predicated region
    $region10: #{prediction_module_forward.1} parent=1 // pred_check
      _
    $region11: #{prediction_module_forward.1} parent=1 // pred_check_branch
      %33 = sbr.rel (0) target = $region13
    $region12: #{prediction_module_forward.1} parent=1 // pred_region
      _
    $region13: #{prediction_module_forward.1} parent=1 // pred_fallthru
      _
    // Predicated region
    $region14: #{prediction_module_forward.1} parent=1 // pred_check
      _
    $region15: #{prediction_module_forward.1} parent=1 // pred_check_branch
      %35 = sbr.rel (0) target = $region17
    $region16: #{prediction_module_forward.1} parent=1 // pred_region
      _
    $region17: #{prediction_module_forward.1} parent=1 // pred_fallthru
      _
    // Predicated region
    $region18: #{prediction_module_forward.1} parent=1 // pred_check
      _
    $region19: #{prediction_module_forward.1} parent=1 // pred_check_branch
      %37 = sbr.rel (0) target = $region21
    $region20: #{prediction_module_forward.1} parent=1 // pred_region
      _
    $region21: #{prediction_module_forward.1} parent=1 // pred_fallthru
      _
    // Predicated region
    $region22: #{prediction_module_forward.1} parent=1 // pred_check
      _
    $region23: #{prediction_module_forward.1} parent=1 // pred_check_branch
      %39 = sbr.rel (0) target = $region25
    $region24: #{prediction_module_forward.1} parent=1 // pred_region
      _
    $region25: #{prediction_module_forward.1} parent=1 // pred_fallthru
      _
    // Predicated region
    $region26: #{prediction_module_forward.1} parent=1 // pred_check
      _
    $region27: #{prediction_module_forward.1} parent=1 // pred_check_branch
      %41 = sbr.rel (0) target = $region29
    $region28: #{prediction_module_forward.1} parent=1 // pred_region
      _
    $region29: #{prediction_module_forward.1} parent=1 // pred_fallthru
      _
    // Predicated region
    $region30: #{prediction_module_forward.1} parent=1 // pred_check
      _
    $region31: #{prediction_module_forward.1} parent=1 // pred_check_branch
      %43 = sbr.rel (0) target = $region33
    $region32: #{prediction_module_forward.1} parent=1 // pred_region
      %45 = dma.done [#allocation4], 4096
    $region33: #{prediction_module_forward.1} parent=1 // pred_fallthru
      _
    %v46 = vld [vmem:[%s0] sm:$0xff]
    %v47 = vld [vmem:[%s0 + $0x8] sm:$0xff]
    %v48 = vld [vmem:[%s0 + $0x10] sm:$0xff]
    %v49 = vld [vmem:[%s0 + $0x18] sm:$0xff]
    %v50 = vld [vmem:[%s0 + $0x20] sm:$0xff]
    %v51 = vld [vmem:[%s0 + $0x28] sm:$0xff]
    %v52 = vld [vmem:[%s0 + $0x30] sm:$0xff]
    %v53 = vld [vmem:[%s0 + $0x38] sm:$0xff]
    %v54 = vld [vmem:[#allocation3] sm:$0xff]
    %v55 = vld [vmem:[#allocation3 + $0x8] sm:$0xff]
    %v56 = vld [vmem:[#allocation3 + $0x10] sm:$0xff]
    %v57 = vld [vmem:[#allocation3 + $0x18] sm:$0xff]
    %v58 = vld [vmem:[#allocation3 + $0x20] sm:$0xff]
    %v59 = vld [vmem:[#allocation3 + $0x28] sm:$0xff]
    %v60 = vld [vmem:[#allocation3 + $0x30] sm:$0xff]
    %v61 = vld [vmem:[#allocation3 + $0x38] sm:$0xff]
    %v62 = vld [vmem:[#allocation3 + $0x40] sm:$0xff]
    %v63 = vld [vmem:[#allocation3 + $0x48] sm:$0xff]
    %v64 = vld [vmem:[#allocation3 + $0x50] sm:$0xff]
    %v65 = vld [vmem:[#allocation3 + $0x58] sm:$0xff]
    %v66 = vld [vmem:[#allocation3 + $0x60] sm:$0xff]
    %v67 = vld [vmem:[#allocation3 + $0x68] sm:$0xff]
    %v68 = vld [vmem:[#allocation3 + $0x70] sm:$0xff]
    %v69 = vld [vmem:[#allocation3 + $0x78] sm:$0xff]
    %v70 = vld [vmem:[#allocation3 + $0x80] sm:$0xff]
    %v71 = vld [vmem:[#allocation3 + $0x88] sm:$0xff]
    %v72 = vld [vmem:[#allocation3 + $0x90] sm:$0xff]
    %v73 = vld [vmem:[#allocation3 + $0x98] sm:$0xff]
    %v74 = vld [vmem:[#allocation3 + $0xa0] sm:$0xff]
    %v75 = vld [vmem:[#allocation3 + $0xa8] sm:$0xff]
    %v76 = vld [vmem:[#allocation3 + $0xb0] sm:$0xff]
    %v77 = vld [vmem:[#allocation3 + $0xb8] sm:$0xff]
    %v78 = vld [vmem:[#allocation3 + $0xc0] sm:$0xff]
    %v79 = vld [vmem:[#allocation3 + $0xc8] sm:$0xff]
    %v80 = vld [vmem:[#allocation3 + $0xd0] sm:$0xff]
    %v81 = vld [vmem:[#allocation3 + $0xd8] sm:$0xff]
    %v82 = vld [vmem:[#allocation3 + $0xe0] sm:$0xff]
    %v83 = vld [vmem:[#allocation3 + $0xe8] sm:$0xff]
    %v84 = vld [vmem:[#allocation3 + $0xf0] sm:$0xff]
    %v85 = vld [vmem:[#allocation3 + $0xf8] sm:$0xff]
    %v86 = vld [vmem:[%s2] sm:$0x3]
    %v88 = vperm.slane %v86, 0
    %v89 = vperm.slane %v86, 1
    %v100 = vunpack.c.l.b16 %v46
    %v101 = vunpack.c.h.b16 %v46
    %v102 = vunpack.c.l.b16 %v47
    %v103 = vunpack.c.h.b16 %v47
    %v104 = vunpack.c.l.b16 %v48
    %v105 = vunpack.c.h.b16 %v48
    %v106 = vunpack.c.l.b16 %v49
    %v107 = vunpack.c.h.b16 %v49
    %v108 = vunpack.c.l.b16 %v50
    %v109 = vunpack.c.h.b16 %v50
    %v110 = vunpack.c.l.b16 %v51
    %v111 = vunpack.c.h.b16 %v51
    %v112 = vunpack.c.l.b16 %v52
    %v113 = vunpack.c.h.b16 %v52
    %v114 = vunpack.c.l.b16 %v53
    %v115 = vunpack.c.h.b16 %v53
    %v116 = vpack.c.b16 %v102, %v100
    %v117 = vpack.c.b16 %v103, %v101
    %v118 = vpack.c.b16 %v106, %v104
    %v119 = vpack.c.b16 %v107, %v105
    %v120 = vpack.c.b16 %v110, %v108
    %v121 = vpack.c.b16 %v111, %v109
    %v122 = vpack.c.b16 %v114, %v112
    %v123 = vpack.c.b16 %v115, %v113
    %v164 = vunpack.c.l.b16 %v54
    %v165 = vunpack.c.h.b16 %v54
    %v166 = vunpack.c.l.b16 %v55
    %v167 = vunpack.c.h.b16 %v55
    %v168 = vunpack.c.l.b16 %v56
    %v169 = vunpack.c.h.b16 %v56
    %v170 = vunpack.c.l.b16 %v57
    %v171 = vunpack.c.h.b16 %v57
    %v172 = vunpack.c.l.b16 %v58
    %v173 = vunpack.c.h.b16 %v58
    %v174 = vunpack.c.l.b16 %v59
    %v175 = vunpack.c.h.b16 %v59
    %v176 = vunpack.c.l.b16 %v60
    %v177 = vunpack.c.h.b16 %v60
    %v178 = vunpack.c.l.b16 %v61
    %v179 = vunpack.c.h.b16 %v61
    %v180 = vunpack.c.l.b16 %v62
    %v181 = vunpack.c.h.b16 %v62
    %v182 = vunpack.c.l.b16 %v63
    %v183 = vunpack.c.h.b16 %v63
    %v184 = vunpack.c.l.b16 %v64
    %v185 = vunpack.c.h.b16 %v64
    %v186 = vunpack.c.l.b16 %v65
    %v187 = vunpack.c.h.b16 %v65
    %v188 = vunpack.c.l.b16 %v66
    %v189 = vunpack.c.h.b16 %v66
    %v190 = vunpack.c.l.b16 %v67
    %v191 = vunpack.c.h.b16 %v67
    %v192 = vunpack.c.l.b16 %v68
    %v193 = vunpack.c.h.b16 %v68
    %v194 = vunpack.c.l.b16 %v69
    %v195 = vunpack.c.h.b16 %v69
    %v196 = vunpack.c.l.b16 %v70
    %v197 = vunpack.c.h.b16 %v70
    %v198 = vunpack.c.l.b16 %v71
    %v199 = vunpack.c.h.b16 %v71
    %v200 = vunpack.c.l.b16 %v72
    %v201 = vunpack.c.h.b16 %v72
    %v202 = vunpack.c.l.b16 %v73
    %v203 = vunpack.c.h.b16 %v73
    %v204 = vunpack.c.l.b16 %v74
    %v205 = vunpack.c.h.b16 %v74
    %v206 = vunpack.c.l.b16 %v75
    %v207 = vunpack.c.h.b16 %v75
    %v208 = vunpack.c.l.b16 %v76
    %v209 = vunpack.c.h.b16 %v76
    %v210 = vunpack.c.l.b16 %v77
    %v211 = vunpack.c.h.b16 %v77
    %v212 = vunpack.c.l.b16 %v78
    %v213 = vunpack.c.h.b16 %v78
    %v214 = vunpack.c.l.b16 %v79
    %v215 = vunpack.c.h.b16 %v79
    %v216 = vunpack.c.l.b16 %v80
    %v217 = vunpack.c.h.b16 %v80
    %v218 = vunpack.c.l.b16 %v81
    %v219 = vunpack.c.h.b16 %v81
    %v220 = vunpack.c.l.b16 %v82
    %v221 = vunpack.c.h.b16 %v82
    %v222 = vunpack.c.l.b16 %v83
    %v223 = vunpack.c.h.b16 %v83
    %v224 = vunpack.c.l.b16 %v84
    %v225 = vunpack.c.h.b16 %v84
    %v226 = vunpack.c.l.b16 %v85
    %v227 = vunpack.c.h.b16 %v85
    %v228 = vpack.c.b16 %v166, %v164
    %v229 = vpack.c.b16 %v167, %v165
    %v230 = vpack.c.b16 %v170, %v168
    %v231 = vpack.c.b16 %v171, %v169
    %v232 = vpack.c.b16 %v174, %v172
    %v233 = vpack.c.b16 %v175, %v173
    %v234 = vpack.c.b16 %v178, %v176
    %v235 = vpack.c.b16 %v179, %v177
    %v236 = vpack.c.b16 %v182, %v180
    %v237 = vpack.c.b16 %v183, %v181
    %v238 = vpack.c.b16 %v186, %v184
    %v239 = vpack.c.b16 %v187, %v185
    %v240 = vpack.c.b16 %v190, %v188
    %v241 = vpack.c.b16 %v191, %v189
    %v242 = vpack.c.b16 %v194, %v192
    %v243 = vpack.c.b16 %v195, %v193
    %v244 = vpack.c.b16 %v198, %v196
    %v245 = vpack.c.b16 %v199, %v197
    %v246 = vpack.c.b16 %v202, %v200
    %v247 = vpack.c.b16 %v203, %v201
    %v248 = vpack.c.b16 %v206, %v204
    %v249 = vpack.c.b16 %v207, %v205
    %v250 = vpack.c.b16 %v210, %v208
    %v251 = vpack.c.b16 %v211, %v209
    %v252 = vpack.c.b16 %v214, %v212
    %v253 = vpack.c.b16 %v215, %v213
    %v254 = vpack.c.b16 %v218, %v216
    %v255 = vpack.c.b16 %v219, %v217
    %v256 = vpack.c.b16 %v222, %v220
    %v257 = vpack.c.b16 %v223, %v221
    %v258 = vpack.c.b16 %v226, %v224
    %v259 = vpack.c.b16 %v227, %v225
    %292 = vmatpush.bf16.msra.mxu0 %v242
    %293 = vmatpush.bf16.msra.mxu0 %v240
    %294 = vmatpush.bf16.msra.mxu0 %v238
    %295 = vmatpush.bf16.msra.mxu0 %v236
    %296 = vmatpush.bf16.msra.mxu0 %v234
    %297 = vmatpush.bf16.msra.mxu0 %v232
    %298 = vmatpush.bf16.msra.mxu0 %v230
    %299 = vmatpush.bf16.msra.mxu0 %v228
    %300 = vmatmul.bf16.gmra.mxu0 %v116
    %v301 = vpop.f32.mrf.mxu0
    %v302 = vadd.f32 %v88, %v301
    %v303 = vpop.f32.mrf.mxu0
    %v304 = vadd.f32 %v88, %v303
    %305 = vmatmul.bf16.gmra.mxu0 %v118
    %v306 = vpop.f32.mrf.mxu0
    %v307 = vadd.f32 %v88, %v306
    %v308 = vpop.f32.mrf.mxu0
    %v309 = vadd.f32 %v88, %v308
    %310 = vmatmul.bf16.gmra.mxu0 %v120
    %v311 = vpop.f32.mrf.mxu0
    %v312 = vadd.f32 %v88, %v311
    %v313 = vpop.f32.mrf.mxu0
    %v314 = vadd.f32 %v88, %v313
    %315 = vmatmul.bf16.gmra.mxu0 %v122
    %v316 = vpop.f32.mrf.mxu0
    %v317 = vadd.f32 %v88, %v316
    %v318 = vpop.f32.mrf.mxu0
    %v319 = vadd.f32 %v88, %v318
    %320 = vdwg.mxu0
    %321 = vmatpush.bf16.msra.mxu0 %v258
    %322 = vmatpush.bf16.msra.mxu0 %v256
    %323 = vmatpush.bf16.msra.mxu0 %v254
    %324 = vmatpush.bf16.msra.mxu0 %v252
    %325 = vmatpush.bf16.msra.mxu0 %v250
    %326 = vmatpush.bf16.msra.mxu0 %v248
    %327 = vmatpush.bf16.msra.mxu0 %v246
    %328 = vmatpush.bf16.msra.mxu0 %v244
    %329 = vmatmul.bf16.gmra.mxu0 %v117
    %v330 = vpop.f32.mrf.mxu0
    %v331 = vadd.f32 %v302, %v330
    %v332 = vpop.f32.mrf.mxu0
    %v333 = vadd.f32 %v304, %v332
    %334 = vmatmul.bf16.gmra.mxu0 %v119
    %v335 = vpop.f32.mrf.mxu0
    %v336 = vadd.f32 %v307, %v335
    %v337 = vpop.f32.mrf.mxu0
    %v338 = vadd.f32 %v309, %v337
    %339 = vmatmul.bf16.gmra.mxu0 %v121
    %v340 = vpop.f32.mrf.mxu0
    %v341 = vadd.f32 %v312, %v340
    %v342 = vpop.f32.mrf.mxu0
    %v343 = vadd.f32 %v314, %v342
    %344 = vmatmul.bf16.gmra.mxu0 %v123
    %v345 = vpop.f32.mrf.mxu0
    %v346 = vadd.f32 %v317, %v345
    %v347 = vpop.f32.mrf.mxu0
    %v348 = vadd.f32 %v319, %v347
    %349 = vdwg.mxu0
    %350 = vmatpush.bf16.msra.mxu0 %v243
    %351 = vmatpush.bf16.msra.mxu0 %v241
    %352 = vmatpush.bf16.msra.mxu0 %v239
    %353 = vmatpush.bf16.msra.mxu0 %v237
    %354 = vmatpush.bf16.msra.mxu0 %v235
    %355 = vmatpush.bf16.msra.mxu0 %v233
    %356 = vmatpush.bf16.msra.mxu0 %v231
    %357 = vmatpush.bf16.msra.mxu0 %v229
    %358 = vmatmul.bf16.gmra.mxu0 %v116
    %v359 = vpop.f32.mrf.mxu0
    %v360 = vadd.f32 %v89, %v359
    %v361 = vpop.f32.mrf.mxu0
    %v362 = vadd.f32 %v89, %v361
    %363 = vmatmul.bf16.gmra.mxu0 %v118
    %v364 = vpop.f32.mrf.mxu0
    %v365 = vadd.f32 %v89, %v364
    %v366 = vpop.f32.mrf.mxu0
    %v367 = vadd.f32 %v89, %v366
    %368 = vmatmul.bf16.gmra.mxu0 %v120
    %v369 = vpop.f32.mrf.mxu0
    %v370 = vadd.f32 %v89, %v369
    %v371 = vpop.f32.mrf.mxu0
    %v372 = vadd.f32 %v89, %v371
    %373 = vmatmul.bf16.gmra.mxu0 %v122
    %v374 = vpop.f32.mrf.mxu0
    %v375 = vadd.f32 %v89, %v374
    %v376 = vpop.f32.mrf.mxu0
    %v377 = vadd.f32 %v89, %v376
    %378 = vdwg.mxu0
    %379 = vmatpush.bf16.msra.mxu0 %v259
    %380 = vmatpush.bf16.msra.mxu0 %v257
    %381 = vmatpush.bf16.msra.mxu0 %v255
    %382 = vmatpush.bf16.msra.mxu0 %v253
    %383 = vmatpush.bf16.msra.mxu0 %v251
    %384 = vmatpush.bf16.msra.mxu0 %v249
    %385 = vmatpush.bf16.msra.mxu0 %v247
    %386 = vmatpush.bf16.msra.mxu0 %v245
    %387 = vmatmul.bf16.gmra.mxu0 %v117
    %v388 = vpop.f32.mrf.mxu0
    %v389 = vadd.f32 %v360, %v388
    %v390 = vpop.f32.mrf.mxu0
    %v391 = vadd.f32 %v362, %v390
    %392 = vmatmul.bf16.gmra.mxu0 %v119
    %v393 = vpop.f32.mrf.mxu0
    %v394 = vadd.f32 %v365, %v393
    %v395 = vpop.f32.mrf.mxu0
    %v396 = vadd.f32 %v367, %v395
    %397 = vmatmul.bf16.gmra.mxu0 %v121
    %v398 = vpop.f32.mrf.mxu0
    %v399 = vadd.f32 %v370, %v398
    %v400 = vpop.f32.mrf.mxu0
    %v401 = vadd.f32 %v372, %v400
    %402 = vmatmul.bf16.gmra.mxu0 %v123
    %v403 = vpop.f32.mrf.mxu0
    %v404 = vadd.f32 %v375, %v403
    %v405 = vpop.f32.mrf.mxu0
    %v406 = vadd.f32 %v377, %v405
    %407 = vdwg.mxu0
    %v408 = vmax.f32 %v331, 0.0
    %v409 = vmax.f32 %v389, 0.0
    %v410 = vmax.f32 %v333, 0.0
    %v411 = vmax.f32 %v391, 0.0
    %v412 = vmax.f32 %v336, 0.0
    %v413 = vmax.f32 %v394, 0.0
    %v414 = vmax.f32 %v338, 0.0
    %v415 = vmax.f32 %v396, 0.0
    %v416 = vmax.f32 %v341, 0.0
    %v417 = vmax.f32 %v399, 0.0
    %v418 = vmax.f32 %v343, 0.0
    %v419 = vmax.f32 %v401, 0.0
    %v420 = vmax.f32 %v346, 0.0
    %v421 = vmax.f32 %v404, 0.0
    %v422 = vmax.f32 %v348, 0.0
    %v423 = vmax.f32 %v406, 0.0
    %v424 = vpack.c.bf16 %v409, %v408
    %v425 = vpack.c.bf16 %v411, %v410
    %v426 = vpack.c.bf16 %v413, %v412
    %v427 = vpack.c.bf16 %v415, %v414
    %v428 = vpack.c.bf16 %v417, %v416
    %v429 = vpack.c.bf16 %v419, %v418
    %v430 = vpack.c.bf16 %v421, %v420
    %v431 = vpack.c.bf16 %v423, %v422
    %v432 = vld [vmem:[%s3] sm:$0xf]
    %v433 = vld [vmem:[%s3 + $0x4] sm:$0xf]
    %v434 = vld [vmem:[%s3 + $0x8] sm:$0xf]
    %v435 = vld [vmem:[%s3 + $0xc] sm:$0xf]
    %v436 = vld [vmem:[%s3 + $0x10] sm:$0xf]
    %v437 = vld [vmem:[%s3 + $0x14] sm:$0xf]
    %v438 = vld [vmem:[%s3 + $0x18] sm:$0xf]
    %v439 = vld [vmem:[%s3 + $0x1c] sm:$0xf]
    %v440 = vld [vmem:[%s3 + $0x20] sm:$0xf]
    %v441 = vld [vmem:[%s3 + $0x24] sm:$0xf]
    %v442 = vld [vmem:[%s3 + $0x28] sm:$0xf]
    %v443 = vld [vmem:[%s3 + $0x2c] sm:$0xf]
    %v444 = vld [vmem:[%s3 + $0x30] sm:$0xf]
    %v445 = vld [vmem:[%s3 + $0x34] sm:$0xf]
    %v446 = vld [vmem:[%s3 + $0x38] sm:$0xf]
    %v447 = vld [vmem:[%s3 + $0x3c] sm:$0xf]
    %v448 = vld [vmem:[%s4] sm:$0x1]
    %v450 = vperm.slane %v448, 0
    %v460 = vunpack.c.l.b16 %v424
    %v461 = vunpack.c.l.b16 %v425
    %v462 = vunpack.c.l.b16 %v426
    %v463 = vunpack.c.l.b16 %v427
    %v464 = vunpack.c.l.b16 %v428
    %v465 = vunpack.c.l.b16 %v429
    %v466 = vunpack.c.l.b16 %v430
    %v467 = vunpack.c.l.b16 %v431
    %v468 = vpack.c.b16 %v461, %v460
    %v469 = vpack.c.b16 %v463, %v462
    %v470 = vpack.c.b16 %v465, %v464
    %v471 = vpack.c.b16 %v467, %v466
    %v492 = vunpack.c.l.b16 %v432
    %v493 = vunpack.c.l.b16 %v433
    %v494 = vunpack.c.l.b16 %v434
    %v495 = vunpack.c.l.b16 %v435
    %v496 = vunpack.c.l.b16 %v436
    %v497 = vunpack.c.l.b16 %v437
    %v498 = vunpack.c.l.b16 %v438
    %v499 = vunpack.c.l.b16 %v439
    %v500 = vunpack.c.l.b16 %v440
    %v501 = vunpack.c.l.b16 %v441
    %v502 = vunpack.c.l.b16 %v442
    %v503 = vunpack.c.l.b16 %v443
    %v504 = vunpack.c.l.b16 %v444
    %v505 = vunpack.c.l.b16 %v445
    %v506 = vunpack.c.l.b16 %v446
    %v507 = vunpack.c.l.b16 %v447
    %v508 = vpack.c.b16 %v493, %v492
    %v509 = vpack.c.b16 %v495, %v494
    %v510 = vpack.c.b16 %v497, %v496
    %v511 = vpack.c.b16 %v499, %v498
    %v512 = vpack.c.b16 %v501, %v500
    %v513 = vpack.c.b16 %v503, %v502
    %v514 = vpack.c.b16 %v505, %v504
    %v515 = vpack.c.b16 %v507, %v506
    %524 = vmatpush.bf16.msra.mxu0 %v515
    %525 = vmatpush.bf16.msra.mxu0 %v514
    %526 = vmatpush.bf16.msra.mxu0 %v513
    %527 = vmatpush.bf16.msra.mxu0 %v512
    %528 = vmatpush.bf16.msra.mxu0 %v511
    %529 = vmatpush.bf16.msra.mxu0 %v510
    %530 = vmatpush.bf16.msra.mxu0 %v509
    %531 = vmatpush.bf16.msra.mxu0 %v508
    %532 = vmatmul.bf16.gmra.mxu0 %v468
    %v533 = vpop.f32.mrf.mxu0
    %v534 = vadd.f32 %v450, %v533
    %v535 = vpop.f32.mrf.mxu0
    %v536 = vadd.f32 %v450, %v535
    %537 = vmatmul.bf16.gmra.mxu0 %v469
    %v538 = vpop.f32.mrf.mxu0
    %v539 = vadd.f32 %v450, %v538
    %v540 = vpop.f32.mrf.mxu0
    %v541 = vadd.f32 %v450, %v540
    %542 = vmatmul.bf16.gmra.mxu0 %v470
    %v543 = vpop.f32.mrf.mxu0
    %v544 = vadd.f32 %v450, %v543
    %v545 = vpop.f32.mrf.mxu0
    %v546 = vadd.f32 %v450, %v545
    %547 = vmatmul.bf16.gmra.mxu0 %v471
    %v548 = vpop.f32.mrf.mxu0
    %v549 = vadd.f32 %v450, %v548
    %v550 = vpop.f32.mrf.mxu0
    %v551 = vadd.f32 %v450, %v550
    %552 = vdwg.mxu0
    %vm553 = vcmask 31744
    %554 = vst.msk [vmem:[%s7] sm:$0xff] %vm553, %v534
    %555 = vst.msk [vmem:[%s7 + $0x8] sm:$0xff] %vm553, %v536
    %556 = vst.msk [vmem:[%s7 + $0x10] sm:$0xff] %vm553, %v539
    %557 = vst.msk [vmem:[%s7 + $0x18] sm:$0xff] %vm553, %v541
    %558 = vst.msk [vmem:[%s7 + $0x20] sm:$0xff] %vm553, %v544
    %559 = vst.msk [vmem:[%s7 + $0x28] sm:$0xff] %vm553, %v546
    %560 = vst.msk [vmem:[%s7 + $0x30] sm:$0xff] %vm553, %v549
    %561 = vst.msk [vmem:[%s7 + $0x38] sm:$0xff] %vm553, %v551
    %v562 = vld [vmem:[%s5] sm:$0xf]
    %v563 = vld [vmem:[%s5 + $0x4] sm:$0xf]
    %v564 = vld [vmem:[%s5 + $0x8] sm:$0xf]
    %v565 = vld [vmem:[%s5 + $0xc] sm:$0xf]
    %v566 = vld [vmem:[%s5 + $0x10] sm:$0xf]
    %v567 = vld [vmem:[%s5 + $0x14] sm:$0xf]
    %v568 = vld [vmem:[%s5 + $0x18] sm:$0xf]
    %v569 = vld [vmem:[%s5 + $0x1c] sm:$0xf]
    %v570 = vld [vmem:[%s5 + $0x20] sm:$0xf]
    %v571 = vld [vmem:[%s5 + $0x24] sm:$0xf]
    %v572 = vld [vmem:[%s5 + $0x28] sm:$0xf]
    %v573 = vld [vmem:[%s5 + $0x2c] sm:$0xf]
    %v574 = vld [vmem:[%s5 + $0x30] sm:$0xf]
    %v575 = vld [vmem:[%s5 + $0x34] sm:$0xf]
    %v576 = vld [vmem:[%s5 + $0x38] sm:$0xf]
    %v577 = vld [vmem:[%s5 + $0x3c] sm:$0xf]
    %v578 = vld [vmem:[#allocation2] sm:$0x1]
    %v580 = vperm.slane %v578, 0
    %v582 = vunpack.c.h.b16 %v424
    %v583 = vunpack.c.h.b16 %v425
    %v584 = vunpack.c.h.b16 %v426
    %v585 = vunpack.c.h.b16 %v427
    %v586 = vunpack.c.h.b16 %v428
    %v587 = vunpack.c.h.b16 %v429
    %v588 = vunpack.c.h.b16 %v430
    %v589 = vunpack.c.h.b16 %v431
    %v590 = vpack.c.b16 %v583, %v582
    %v591 = vpack.c.b16 %v585, %v584
    %v592 = vpack.c.b16 %v587, %v586
    %v593 = vpack.c.b16 %v589, %v588
    %v614 = vunpack.c.l.b16 %v562
    %v615 = vunpack.c.l.b16 %v563
    %v616 = vunpack.c.l.b16 %v564
    %v617 = vunpack.c.l.b16 %v565
    %v618 = vunpack.c.l.b16 %v566
    %v619 = vunpack.c.l.b16 %v567
    %v620 = vunpack.c.l.b16 %v568
    %v621 = vunpack.c.l.b16 %v569
    %v622 = vunpack.c.l.b16 %v570
    %v623 = vunpack.c.l.b16 %v571
    %v624 = vunpack.c.l.b16 %v572
    %v625 = vunpack.c.l.b16 %v573
    %v626 = vunpack.c.l.b16 %v574
    %v627 = vunpack.c.l.b16 %v575
    %v628 = vunpack.c.l.b16 %v576
    %v629 = vunpack.c.l.b16 %v577
    %v630 = vpack.c.b16 %v615, %v614
    %v631 = vpack.c.b16 %v617, %v616
    %v632 = vpack.c.b16 %v619, %v618
    %v633 = vpack.c.b16 %v621, %v620
    %v634 = vpack.c.b16 %v623, %v622
    %v635 = vpack.c.b16 %v625, %v624
    %v636 = vpack.c.b16 %v627, %v626
    %v637 = vpack.c.b16 %v629, %v628
    %646 = vmatpush.bf16.msra.mxu0 %v637
    %647 = vmatpush.bf16.msra.mxu0 %v636
    %648 = vmatpush.bf16.msra.mxu0 %v635
    %649 = vmatpush.bf16.msra.mxu0 %v634
    %650 = vmatpush.bf16.msra.mxu0 %v633
    %651 = vmatpush.bf16.msra.mxu0 %v632
    %652 = vmatpush.bf16.msra.mxu0 %v631
    %653 = vmatpush.bf16.msra.mxu0 %v630
    %654 = vmatmul.bf16.gmra.mxu0 %v590
    %v655 = vpop.f32.mrf.mxu0
    %v656 = vadd.f32 %v580, %v655
    %v657 = vpop.f32.mrf.mxu0
    %v658 = vadd.f32 %v580, %v657
    %659 = vmatmul.bf16.gmra.mxu0 %v591
    %v660 = vpop.f32.mrf.mxu0
    %v661 = vadd.f32 %v580, %v660
    %v662 = vpop.f32.mrf.mxu0
    %v663 = vadd.f32 %v580, %v662
    %664 = vmatmul.bf16.gmra.mxu0 %v592
    %v665 = vpop.f32.mrf.mxu0
    %v666 = vadd.f32 %v580, %v665
    %v667 = vpop.f32.mrf.mxu0
    %v668 = vadd.f32 %v580, %v667
    %669 = vmatmul.bf16.gmra.mxu0 %v593
    %v670 = vpop.f32.mrf.mxu0
    %v671 = vadd.f32 %v580, %v670
    %v672 = vpop.f32.mrf.mxu0
    %v673 = vadd.f32 %v580, %v672
    %674 = vdwg.mxu0
    %vm675 = vcmask 7168
    %676 = vst.msk [vmem:[%s8] sm:$0xff] %vm675, %v656
    %677 = vst.msk [vmem:[%s8 + $0x8] sm:$0xff] %vm675, %v658
    %678 = vst.msk [vmem:[%s8 + $0x10] sm:$0xff] %vm675, %v661
    %679 = vst.msk [vmem:[%s8 + $0x18] sm:$0xff] %vm675, %v663
    %680 = vst.msk [vmem:[%s8 + $0x20] sm:$0xff] %vm675, %v666
    %681 = vst.msk [vmem:[%s8 + $0x28] sm:$0xff] %vm675, %v668
    %682 = vst.msk [vmem:[%s8 + $0x30] sm:$0xff] %vm675, %v671
    %683 = vst.msk [vmem:[%s8 + $0x38] sm:$0xff] %vm675, %v673
    // Predicated region
    $region34: #{prediction_module_forward.1} parent=1 // pred_check
      _
    $region35: #{prediction_module_forward.1} parent=1 // pred_check_branch
      %685 = sbr.rel (0) target = $region37
    $region36: #{prediction_module_forward.1} parent=1 // pred_region
      _
    $region37: #{prediction_module_forward.1} parent=1 // pred_fallthru
      _
    // Predicated region
    $region38: #{prediction_module_forward.1} parent=1 // pred_check
      _
    $region39: #{prediction_module_forward.1} parent=1 // pred_check_branch
      %687 = sbr.rel (0) target = $region41
    $region40: #{prediction_module_forward.1} parent=1 // pred_region
      _
    $region41: #{prediction_module_forward.1} parent=1 // pred_fallthru
      _
    // Predicated region
    $region42: #{prediction_module_forward.1} parent=1 // pred_check
      _
    $region43: #{prediction_module_forward.1} parent=1 // pred_check_branch
      %689 = sbr.rel (0) target = $region45
    $region44: #{prediction_module_forward.1} parent=1 // pred_region
      _
    $region45: #{prediction_module_forward.1} parent=1 // pred_fallthru
      _
    // Predicated region
    $region46: #{prediction_module_forward.1} parent=1 // pred_check
      _
    $region47: #{prediction_module_forward.1} parent=1 // pred_check_branch
      %691 = sbr.rel (0) target = $region49
    $region48: #{prediction_module_forward.1} parent=1 // pred_region
      _
    $region49: #{prediction_module_forward.1} parent=1 // pred_fallthru
      _
    %692 = vsyncpa [#allocation4], 1

</llo_original>
